<compile_context>
chip_gen: v5e
topology: v5e:2x2
jax: 0.10.0
libtpu: 0.0.40
codegen_flags: <defaults>
</compile_context>

<pallas_src>
import functools
import math

import jax
import jax.numpy as jnp
from jax import lax
from jax.experimental import pallas as pl
from jax.experimental.pallas import tpu as pltpu


# ----------------------------------------------------------------------------
# helpers
# ----------------------------------------------------------------------------
def _pick_tile(dim, target, mult):
    """Largest multiple of `mult` that divides `dim` and is <= `target`.
    Falls back to the full dimension (always a legal Pallas block)."""
    if dim <= target:
        return dim
    t = (target // mult) * mult
    while t >= mult:
        if dim % t == 0:
            return t
        t -= mult
    return dim


# ----------------------------------------------------------------------------
# Kernel 1: LayerNorm over the channel dim (large row tiles over the grid)
# ----------------------------------------------------------------------------
def _layernorm_kernel(x_ref, w_ref, b_ref, o_ref, *, eps):
    x = x_ref[...].astype(jnp.float32)
    mean = jnp.mean(x, axis=-1, keepdims=True)
    xc = x - mean
    var = jnp.mean(xc * xc, axis=-1, keepdims=True)
    inv = lax.rsqrt(var + eps)
    o_ref[...] = (xc * inv * w_ref[...] + b_ref[...]).astype(o_ref.dtype)


def layernorm(x, weight, bias, eps=1e-5, out_dtype=None, block_rows=512):
    M, D = x.shape
    out_dtype = x.dtype if out_dtype is None else out_dtype
    bm = _pick_tile(M, block_rows, 16)
    return pl.pallas_call(
        functools.partial(_layernorm_kernel, eps=eps),
        out_shape=jax.ShapeDtypeStruct((M, D), out_dtype),
        grid=(M // bm,),
        in_specs=[
            pl.BlockSpec((bm, D), lambda i: (i, 0)),
            pl.BlockSpec((1, D), lambda i: (0, 0)),
            pl.BlockSpec((1, D), lambda i: (0, 0)),
        ],
        out_specs=pl.BlockSpec((bm, D), lambda i: (i, 0)),
        compiler_params=pltpu.CompilerParams(dimension_semantics=("parallel",)),
    )(x, weight.reshape(1, D), bias.reshape(1, D))


# ----------------------------------------------------------------------------
# Kernel 2: tiled (i, j, k) matmul with f32 VMEM accumulator, bf16 MXU inputs
# ----------------------------------------------------------------------------
def _matmul_kernel(a_ref, b_ref, o_ref, acc_ref):
    @pl.when(pl.program_id(2) == 0)
    def _():
        acc_ref[...] = jnp.zeros_like(acc_ref)

    acc_ref[...] += jnp.dot(
        a_ref[...].astype(b_ref.dtype), b_ref[...],
        preferred_element_type=jnp.float32)

    @pl.when(pl.program_id(2) == pl.num_programs(2) - 1)
    def _():
        o_ref[...] = acc_ref[...].astype(o_ref.dtype)


def matmul(a, b, out_dtype=jnp.float32, tm=256, tn=256, tk=512):
    M, K = a.shape
    K2, N = b.shape
    assert K == K2
    tm = _pick_tile(M, tm, 16)
    tn = _pick_tile(N, tn, 128)
    tk = _pick_tile(K, tk, 128)
    return pl.pallas_call(
        _matmul_kernel,
        out_shape=jax.ShapeDtypeStruct((M, N), out_dtype),
        grid=(M // tm, N // tn, K // tk),
        in_specs=[
            pl.BlockSpec((tm, tk), lambda i, j, k: (i, k)),
            pl.BlockSpec((tk, tn), lambda i, j, k: (k, j)),
        ],
        out_specs=pl.BlockSpec((tm, tn), lambda i, j, k: (i, j)),
        scratch_shapes=[pltpu.VMEM((tm, tn), jnp.float32)],
        compiler_params=pltpu.CompilerParams(
            dimension_semantics=("parallel", "parallel", "arbitrary")),
    )(a, b)


# ----------------------------------------------------------------------------
# Kernel 3: causal depthwise conv1d + SiLU (padding done in VMEM, no jnp.pad)
# ----------------------------------------------------------------------------
def _dwconv_silu_kernel(x_ref, w_ref, b_ref, o_ref, pad_ref, *, K, PAD):
    L, C = x_ref.shape
    pad_ref[0:PAD, :] = jnp.zeros((PAD, C), jnp.float32)          # causal zeros
    pad_ref[PAD:PAD + L, :] = x_ref[...].astype(jnp.float32)
    acc = jnp.zeros((L, C), jnp.float32) + b_ref[...]
    for k in range(K):                                            # static taps
        off = PAD - (K - 1) + k
        acc = acc + pad_ref[off:off + L, :] * w_ref[k:k + 1, :]
    sig = pl.reciprocal(1.0 + jnp.exp(-acc), approx=True)         # SiLU
    o_ref[...] = (acc * sig).astype(o_ref.dtype)


def dwconv_silu(x, w, b):
    Bb, L, C = x.shape
    K = w.shape[0]
    PAD = 8                       # sublane-aligned left-pad region (>= K - 1)
    assert K - 1 <= PAD
    return pl.pallas_call(
        functools.partial(_dwconv_silu_kernel, K=K, PAD=PAD),
        out_shape=jax.ShapeDtypeStruct((Bb, L, C), jnp.float32),
        grid=(Bb,),
        in_specs=[
            pl.BlockSpec((None, L, C), lambda i: (i, 0, 0)),
            pl.BlockSpec((K, C), lambda i: (0, 0)),
            pl.BlockSpec((1, C), lambda i: (0, 0)),
        ],
        out_specs=pl.BlockSpec((None, L, C), lambda i: (i, 0, 0)),
        scratch_shapes=[pltpu.VMEM((L + PAD, C), jnp.float32)],
        compiler_params=pltpu.CompilerParams(dimension_semantics=("parallel",)),
    )(x, w, b.reshape(1, C))
    # TODO(synk): tile L with a (K-1)-row halo carry for very long sequences
    # where a full (L, C) block would not fit VMEM.


# ----------------------------------------------------------------------------
# Kernel 4: fused x_proj + dt_proj (single kernel, no x_dbl HBM round trip)
# ----------------------------------------------------------------------------
def _xproj_dtproj_kernel(x_ref, xw_ref, dtw_ref, dt_ref, bc_ref, *, dt_rank):
    xdbl = jnp.dot(x_ref[...].astype(xw_ref.dtype), xw_ref[...],
                   preferred_element_type=jnp.float32)     # (tm, R + 2S)
    dt_low = xdbl[:, :dt_rank].astype(dtw_ref.dtype)
    dt_ref[...] = jnp.dot(dt_low, dtw_ref[...],
                          preferred_element_type=jnp.float32).astype(dt_ref.dtype)
    bc_ref[...] = xdbl[:, dt_rank:].astype(bc_ref.dtype)


def xproj_dtproj(x, x_proj_w, dt_proj_w, dt_rank, d_state):
    M, d_inner = x.shape
    n_xp = x_proj_w.shape[1]
    assert n_xp == dt_rank + 2 * d_state
    tm = _pick_tile(M, 256, 16)
    return pl.pallas_call(
        functools.partial(_xproj_dtproj_kernel, dt_rank=dt_rank),
        out_shape=(jax.ShapeDtypeStruct((M, d_inner), jnp.float32),
                   jax.ShapeDtypeStruct((M, 2 * d_state), jnp.float32)),
        grid=(M // tm,),
        in_specs=[
            pl.BlockSpec((tm, d_inner), lambda i: (i, 0)),
            pl.BlockSpec((d_inner, n_xp), lambda i: (0, 0)),
            pl.BlockSpec((dt_rank, d_inner), lambda i: (0, 0)),
        ],
        out_specs=(pl.BlockSpec((tm, d_inner), lambda i: (i, 0)),
                   pl.BlockSpec((tm, 2 * d_state), lambda i: (i, 0))),
        compiler_params=pltpu.CompilerParams(dimension_semantics=("parallel",)),
    )(x, x_proj_w, dt_proj_w)


# ----------------------------------------------------------------------------
# Kernel 5: selective scan (SSM recurrence), L-chunked, elementwise hoisted
# ----------------------------------------------------------------------------
def _scan_kernel(u_ref, dt_ref, bs_ref, cs_ref, z_ref, a_ref, d_ref, dtb_ref,
                 o_ref, h_ref, da_ref, dbu_ref, hist_ref):
    TL = u_ref.shape[0]

    @pl.when(pl.program_id(1) == 0)          # new sequence -> reset SSM state
    def _():
        h_ref[...] = jnp.zeros_like(h_ref)

    # ---- hoisted, chunk-vectorized elementwise work (full-tile EUP/VPU) -----
    u = u_ref[...]                                              # (TL, d_inner)
    z = z_ref[...]                                              # (TL, d_inner)
    dt = dt_ref[...] + dtb_ref[...]
    # numerically stable softplus
    delta = jnp.where(dt > 20.0, dt,
                      jnp.log(1.0 + jnp.exp(jnp.minimum(dt, 20.0))))
    du = delta * u                                              # (TL, d_inner)
    A = a_ref[...]                                              # (S,  d_inner)
    Bc = bs_ref[...]                                            # (TL, S)
    Cc = cs_ref[...]                                            # (TL, S)

    da_ref[...] = jnp.exp(delta[:, None, :] * A[None, :, :])    # (TL,S,d_inner)
    dbu_ref[...] = Bc[:, :, None] * du[:, None, :]              # (TL,S,d_inner)

    # ---- the only true recurrence: h[t] = dA[t] * h[t-1] + dB[t]*u[t] -------
    @pl.loop(0, TL)
    def _(t):
        h = da_ref[t] * h_ref[...] + dbu_ref[t]
        h_ref[...] = h
        hist_ref[t] = h

    # ---- chunk-vectorized epilogue + one full-chunk (dense) store -----------
    y = jnp.sum(hist_ref[...] * Cc[:, :, None], axis=1) + d_ref[...] * u
    gate = z * pl.reciprocal(1.0 + jnp.exp(-z), approx=True)    # SiLU(z)
    o_ref[...] = (y * gate).astype(o_ref.dtype)


def selective_scan(u, dt_raw, Bseq, Cseq, z, A_t, Dvec, dt_bias, chunk=32):
    Bb, L, d_inner = u.shape
    d_state = A_t.shape[0]
    TL = _pick_tile(L, chunk, 8)
    return pl.pallas_call(
        _scan_kernel,
        out_shape=jax.ShapeDtypeStruct((Bb, L, d_inner), jnp.float32),
        grid=(Bb, L // TL),
        in_specs=[
            pl.BlockSpec((None, TL, d_inner), lambda b, c: (b, c, 0)),   # u
            pl.BlockSpec((None, TL, d_inner), lambda b, c: (b, c, 0)),   # dt_raw
            pl.BlockSpec((None, TL, d_state), lambda b, c: (b, c, 0)),   # B(t)
            pl.BlockSpec((None, TL, d_state), lambda b, c: (b, c, 0)),   # C(t)
            pl.BlockSpec((None, TL, d_inner), lambda b, c: (b, c, 0)),   # z
            pl.BlockSpec((d_state, d_inner), lambda b, c: (0, 0)),       # A^T
            pl.BlockSpec((1, d_inner), lambda b, c: (0, 0)),             # D
            pl.BlockSpec((1, d_inner), lambda b, c: (0, 0)),             # dt bias
        ],
        out_specs=pl.BlockSpec((None, TL, d_inner), lambda b, c: (b, c, 0)),
        scratch_shapes=[
            pltpu.VMEM((d_state, d_inner), jnp.float32),      # h carry
            pltpu.VMEM((TL, d_state, d_inner), jnp.float32),  # exp(delta*A)
            pltpu.VMEM((TL, d_state, d_inner), jnp.float32),  # B * delta * u
            pltpu.VMEM((TL, d_state, d_inner), jnp.float32),  # h history
        ],
        compiler_params=pltpu.CompilerParams(
            dimension_semantics=("parallel", "arbitrary")),
    )(u, dt_raw, Bseq, Cseq, z, A_t, Dvec, dt_bias)


# ----------------------------------------------------------------------------
# Mamba mixer (glue in JAX, hot paths in the Pallas kernels above)
# ----------------------------------------------------------------------------
def mamba_mixer(p, x):
    B, L, D = x.shape
    d_inner = p["in_proj"].shape[1] // 2
    d_state = p["A_log"].shape[1]
    dt_rank = p["dt_proj_w"].shape[0]

    # in_proj -> split into x (conv branch) and z (gate)
    xz = matmul(x.reshape(B * L, D), p["in_proj"]).reshape(B, L, 2 * d_inner)
    xc, z = xz[..., :d_inner], xz[..., d_inner:]

    # causal depthwise conv1d + SiLU (padding handled inside the kernel)
    xconv = dwconv_silu(xc, p["conv_w"], p["conv_b"])

    # fused x_proj + dt_proj
    dt_raw, bc = xproj_dtproj(xconv.reshape(B * L, d_inner),
                              p["x_proj"], p["dt_proj_w"], dt_rank, d_state)
    dt_raw = dt_raw.reshape(B, L, d_inner)
    Bseq = bc[:, :d_state].reshape(B, L, d_state)   # time on sublanes
    Cseq = bc[:, d_state:].reshape(B, L, d_state)

    A_t = (-jnp.exp(p["A_log"])).T                  # (d_state, d_inner)

    y = selective_scan(xconv, dt_raw, Bseq, Cseq, z, A_t,
                       p["D"].reshape(1, d_inner),
                       p["dt_bias"].reshape(1, d_inner))

    return matmul(y.reshape(B * L, d_inner), p["out_proj"]).reshape(B, L, D)


# ----------------------------------------------------------------------------
# Block forward: residual bookkeeping + LayerNorm + mixer
# ----------------------------------------------------------------------------
def block_forward(params, hidden_states, residual=None):
    """fused_add_norm=False path of Block.forward (matches the spec):
        if residual is None: residual = hidden_states
        else:                residual = drop_path(hidden_states)   # Identity
        hidden_states = norm(residual.to(norm.weight.dtype))
        hidden_states = mixer(hidden_states)
        return hidden_states, residual
    residual_in_fp32=False -> residual keeps its dtype.
    """
    out_dtype = hidden_states.dtype
    if residual is None:
        residual = hidden_states
    else:
        # drop_path(0.0) == Identity.  NOTE: this spec's Block does NOT add the
        # incoming residual; it re-bases it to drop_path(hidden_states).
        residual = hidden_states
    B, L, D = hidden_states.shape
    normed = layernorm(
        residual.reshape(B * L, D).astype(params["norm_w"].dtype),
        params["norm_w"], params["norm_b"],
        out_dtype=jnp.bfloat16,   # in_proj (the only consumer) runs bf16 on MXU
    ).reshape(B, L, D)
    hidden_states = mamba_mixer(params, normed).astype(out_dtype)
    return hidden_states, residual
    # TODO(synk): DropPath with drop_path > 0 (stochastic depth) and the
    # inference_params / allocate_inference_cache decode path are not
    # implemented here.


# ----------------------------------------------------------------------------
# Deterministic parameter initialization (synthetic, matches Mamba shapes)
# ----------------------------------------------------------------------------
def init_params(dim, expand=2, d_state=16, d_conv=4, seed=42):
    d_inner = expand * dim
    dt_rank = math.ceil(dim / 16)
    ks = jax.random.split(jax.random.PRNGKey(seed), 8)
    f32, bf16 = jnp.float32, jnp.bfloat16
    return {
        "norm_w": jnp.ones((dim,), f32),
        "norm_b": jnp.zeros((dim,), f32),
        # projection weights stored in bf16 (fast MXU path, f32 accumulation)
        "in_proj": (0.1 * jax.random.normal(ks[0], (dim, 2 * d_inner), f32)).astype(bf16),
        "conv_w": 0.1 * jax.random.normal(ks[1], (d_conv, d_inner), f32),
        "conv_b": 0.1 * jax.random.normal(ks[2], (d_inner,), f32),
        "x_proj": (0.1 * jax.random.normal(
            ks[3], (d_inner, dt_rank + 2 * d_state), f32)).astype(bf16),
        "dt_proj_w": ((dt_rank ** -0.5) * jax.random.normal(
            ks[4], (dt_rank, d_inner), f32)).astype(bf16),
        "dt_bias": 0.1 * jax.random.normal(ks[5], (d_inner,), f32),
        "A_log": jnp.log(
            jnp.broadcast_to(jnp.arange(1, d_state + 1, dtype=f32),
                             (d_inner, d_state))),
        "D": jnp.ones((d_inner,), f32),
        "out_proj": (0.1 * jax.random.normal(ks[6], (d_inner, dim), f32)).astype(bf16),
    }


if __name__ == "__main__":
    dim = 32          # model dim D
    B, L = 2, 16      # batch, sequence length

    params = init_params(dim)
    x = jax.random.normal(jax.random.PRNGKey(0), (B, L, dim), jnp.float32)

    # first block: residual is None
    hs, res = block_forward(params, x, residual=None)
    # second block: residual provided (exercises the other branch)
    hs2, res2 = block_forward(params, hs, residual=res)

    jax.block_until_ready((hs, res, hs2, res2))
    assert hs.shape == (B, L, dim) and res.shape == (B, L, dim)
    assert jnp.all(jnp.isfinite(hs)) and jnp.all(jnp.isfinite(hs2))
    print("KERNEL_OK")
</pallas_src>

<mosaic_0001>
module attributes {stable_mosaic.version = 11 : i64} {
  func.func @_layernorm_kernel(%arg0: i32, %arg1: memref<32x32xf32, #tpu.memory_space<vmem>>, %arg2: memref<1x32xf32, #tpu.memory_space<vmem>>, %arg3: memref<1x32xf32, #tpu.memory_space<vmem>>, %arg4: memref<32x32xbf16, #tpu.memory_space<vmem>>) attributes {dimension_semantics = [#tpu.dimension_semantics<parallel>], iteration_bounds = array<i64: 1>, scalar_prefetch = 0 : i64, scratch_operands = 0 : i64, tpu.core_type = #tpu.core_type<tc>, window_params = [{transform_indices = @transform_0, window_bounds = array<i64: 32, 32>}, {pipeline_mode = #tpu.pipeline_mode<synchronous>, transform_indices = @transform_1, window_bounds = array<i64: 1, 32>}, {pipeline_mode = #tpu.pipeline_mode<synchronous>, transform_indices = @transform_2, window_bounds = array<i64: 1, 32>}, {transform_indices = @transform_3, window_bounds = array<i64: 32, 32>}]} {
    %c0 = arith.constant 0 : index
    %c0_0 = arith.constant 0 : index
    %0 = vector.load %arg1[%c0, %c0_0] : memref<32x32xf32, #tpu.memory_space<vmem>>, vector<32x32xf32>
    %cst = arith.constant dense<0.000000e+00> : vector<32xf32>
    %1 = vector.multi_reduction <add>, %0, %cst [1] : vector<32x32xf32> to vector<32xf32>
    %2 = vector.shape_cast %1 : vector<32xf32> to vector<32x1xf32>
    %cst_1 = arith.constant 3.200000e+01 : f32
    %3 = vector.broadcast %cst_1 : f32 to vector<32x1xf32>
    %4 = arith.divf %2, %3 : vector<32x1xf32>
    %5 = vector.broadcast %4 : vector<32x1xf32> to vector<32x32xf32>
    %6 = arith.subf %0, %5 : vector<32x32xf32>
    %7 = arith.mulf %6, %6 : vector<32x32xf32>
    %cst_2 = arith.constant dense<0.000000e+00> : vector<32xf32>
    %8 = vector.multi_reduction <add>, %7, %cst_2 [1] : vector<32x32xf32> to vector<32xf32>
    %9 = vector.shape_cast %8 : vector<32xf32> to vector<32x1xf32>
    %cst_3 = arith.constant 3.200000e+01 : f32
    %10 = vector.broadcast %cst_3 : f32 to vector<32x1xf32>
    %11 = arith.divf %9, %10 : vector<32x1xf32>
    %cst_4 = arith.constant 9.99999974E-6 : f32
    %12 = vector.broadcast %cst_4 : f32 to vector<32x1xf32>
    %13 = arith.addf %11, %12 : vector<32x1xf32>
    %14 = math.rsqrt %13 : vector<32x1xf32>
    %15 = vector.broadcast %14 : vector<32x1xf32> to vector<32x32xf32>
    %16 = arith.mulf %6, %15 : vector<32x32xf32>
    %c0_5 = arith.constant 0 : index
    %c0_6 = arith.constant 0 : index
    %17 = vector.load %arg2[%c0_5, %c0_6] : memref<1x32xf32, #tpu.memory_space<vmem>>, vector<1x32xf32>
    %18 = vector.broadcast %17 : vector<1x32xf32> to vector<32x32xf32>
    %19 = arith.mulf %16, %18 : vector<32x32xf32>
    %c0_7 = arith.constant 0 : index
    %c0_8 = arith.constant 0 : index
    %20 = vector.load %arg3[%c0_7, %c0_8] : memref<1x32xf32, #tpu.memory_space<vmem>>, vector<1x32xf32>
    %21 = vector.broadcast %20 : vector<1x32xf32> to vector<32x32xf32>
    %22 = arith.addf %19, %21 : vector<32x32xf32>
    %23 = arith.truncf %22 : vector<32x32xf32> to vector<32x32xbf16>
    %c0_9 = arith.constant 0 : index
    %c0_10 = arith.constant 0 : index
    %24 = vector.load %arg4[%c0_9, %c0_10] : memref<32x32xbf16, #tpu.memory_space<vmem>>, vector<32x32xbf16>
    tpu.vector_store %arg4[%c0_9, %c0_10], %23 {strides = array<i32>} : memref<32x32xbf16, #tpu.memory_space<vmem>>, vector<32x32xbf16>,
    return
  }
  func.func @transform_0(%arg0: i32) -> (i32, i32) {
    %c0_i32 = arith.constant 0 : i32
    %c0_i32_0 = arith.constant 0 : i32
    return %arg0, %c0_i32 : i32, i32
  }
  func.func @transform_1(%arg0: i32) -> (i32, i32) {
    %c0_i32 = arith.constant 0 : i32
    %c0_i32_0 = arith.constant 0 : i32
    %c0_i32_1 = arith.constant 0 : i32
    return %c0_i32, %c0_i32_0 : i32, i32
  }
  func.func @transform_2(%arg0: i32) -> (i32, i32) {
    %c0_i32 = arith.constant 0 : i32
    %c0_i32_0 = arith.constant 0 : i32
    %c0_i32_1 = arith.constant 0 : i32
    return %c0_i32, %c0_i32_0 : i32, i32
  }
  func.func @transform_3(%arg0: i32) -> (i32, i32) {
    %c0_i32 = arith.constant 0 : i32
    %c0_i32_0 = arith.constant 0 : i32
    return %arg0, %c0_i32 : i32, i32
  }
}

</mosaic_0001>

<llo_original>
// kernel: tpu_custom_call.1
$region0: #{tpu_custom_call.1}
  #allocation0 [shape = 'u32[]', space=smem, size = 0x4, offset = 0x4, fixed_abs, tag = 'smem constant byte address 0x4 - core index']
  #allocation1 [shape = 'u32[72,128]{1,0:T(1,128)}', space=vmem, size = 0x9000, scoped, tag = 'internal scratch']
  %s0 = inlined_call_operand.hbm [shape: f32[32,32], index: 0, kind: input, shape index: {}]
  %s1 = inlined_call_operand.hbm [shape: f32[1,32], index: 1, kind: input, shape index: {}]
  %s2 = inlined_call_operand.vmem [shape: f32[1,32], index: 2, kind: input, shape index: {}]
  %s3 = inlined_call_operand.hbm [shape: bf16[32,32], index: 3, kind: output, shape index: {}]
  %s4 = sld [smem:[#allocation0]]
  $region30: #{tpu_custom_call.1} parent=0
    _
  %s6 = ssub.s32 1, %s4
  %s7 = scalar_select 0, %s6, %s4
  $region1: #{tpu_custom_call.1} parent=0
    #allocation2 [shape = 'u8[16384]{0}', space=vmem, size = 0x4000, scoped, tag = 'input window, operand 0, single buffered']
    #allocation3 [shape = 's32[1]{0}', space=sflag, size = 0x4, scoped, tag = 'scoped memory for tpu_custom_call.1']
    #allocation4 [shape = 's32[1]{0}', space=sflag, size = 0x4, scoped, tag = 'scoped memory for tpu_custom_call.1']
    #allocation5 [shape = 'u8[512]{0}', space=vmem, size = 0x400, scoped, tag = 'input window, operand 1, single buffered']
    #allocation6 [shape = 's32[1]{0}', space=sflag, size = 0x4, scoped, tag = 'scoped memory for tpu_custom_call.1']
    #allocation7 [shape = 'u8[8192]{0}', space=vmem, size = 0x2000, scoped, tag = 'output window, operand 0, single buffered']
    %8 = vsyncpa [#allocation3], 0
    %9 = vsyncpa [#allocation6], 0
    %10 = vsyncpa [#allocation4], 0
    // Predicated region
    $region2: #{tpu_custom_call.1} parent=1 // pred_check
      _
    $region3: #{tpu_custom_call.1} parent=1 // pred_check_branch
      %12 = sbr.rel (0) target = $region5
    $region4: #{tpu_custom_call.1} parent=1 // pred_region
      %14 = vsyncadd [#allocation3], 0
      %s15 = sshll.u32 %s0, 4
      %s16 = int_to_ptr.hbm [resolvable:$true] %s15
      %s17 = sshll.u32 [#allocation2], 4
      %s18 = int_to_ptr.vmem [resolvable:$true] %s17
      %23 = dma.hbm_to_vmem [thread:$0]  %s16, 512, %s18, [#allocation3], 128, 128, 8
    $region5: #{tpu_custom_call.1} parent=1 // pred_fallthru
      _
    // Predicated region
    $region6: #{tpu_custom_call.1} parent=1 // pred_check
      _
    $region7: #{tpu_custom_call.1} parent=1 // pred_check_branch
      %25 = sbr.rel (0) target = $region9
    $region8: #{tpu_custom_call.1} parent=1 // pred_region
      %27 = vsyncadd [#allocation6], 0
      %s29 = sshll.u32 %s1, 4
      %s30 = int_to_ptr.hbm [resolvable:$true] %s29
      %s31 = sshll.u32 [#allocation5], 4
      %s32 = int_to_ptr.vmem [resolvable:$true] %s31
      %34 = dma.hbm_to_vmem [thread:$0]  %s30, 16, %s32, [#allocation6]
    $region9: #{tpu_custom_call.1} parent=1 // pred_fallthru
      _
    // Predicated region
    $region10: #{tpu_custom_call.1} parent=1 // pred_check
      _
    $region11: #{tpu_custom_call.1} parent=1 // pred_check_branch
      %36 = sbr.rel (0) target = $region13
    $region12: #{tpu_custom_call.1} parent=1 // pred_region
      _
    $region13: #{tpu_custom_call.1} parent=1 // pred_fallthru
      _
    // Predicated region
    $region14: #{tpu_custom_call.1} parent=1 // pred_check
      _
    $region15: #{tpu_custom_call.1} parent=1 // pred_check_branch
      %38 = sbr.rel (0) target = $region17
    $region16: #{tpu_custom_call.1} parent=1 // pred_region
      %40 = dma.done [#allocation3], 512
    $region17: #{tpu_custom_call.1} parent=1 // pred_fallthru
      _
    // Predicated region
    $region18: #{tpu_custom_call.1} parent=1 // pred_check
      _
    $region19: #{tpu_custom_call.1} parent=1 // pred_check_branch
      %42 = sbr.rel (0) target = $region21
    $region20: #{tpu_custom_call.1} parent=1 // pred_region
      %44 = dma.done [#allocation6], 16
    $region21: #{tpu_custom_call.1} parent=1 // pred_fallthru
      _
    %v45 = vld [vmem:[#allocation2] sm:$0xff]
    %v46 = vld [vmem:[#allocation2 + $0x8] sm:$0xff]
    %v47 = vld [vmem:[#allocation2 + $0x10] sm:$0xff]
    %v48 = vld [vmem:[#allocation2 + $0x18] sm:$0xff]
    %vm49 = vcmask 261120
    %v50 = vsel %vm49, %v45, 0.0
    %51 = vadd.xlane.f32.xlu0 %v50
    %v52 = vpop.xlane.xlu0 %51
    %v53 = vsel %vm49, %v46, 0.0
    %54 = vadd.xlane.f32.xlu0 %v53
    %v55 = vpop.xlane.xlu0 %54
    %v56 = vsel %vm49, %v47, 0.0
    %57 = vadd.xlane.f32.xlu0 %v56
    %v58 = vpop.xlane.xlu0 %57
    %v59 = vsel %vm49, %v48, 0.0
    %60 = vadd.xlane.f32.xlu0 %v59
    %v61 = vpop.xlane.xlu0 %60
    %v62 = vrcp.pop 32.0
    %v63 = vmul.f32 32.0, %v62
    %v64 = vsub.f32 1.0, %v63
    %v65 = vmul.f32 %v62, %v64
    %v66 = vadd.f32 %v62, %v65
    %vm67 = vweird.f32 %v62
    %v68 = vsel %vm67, %v62, %v66
    %v69 = vmul.f32 %v52, %v68
    %v70 = vmul.f32 %v55, %v68
    %v71 = vmul.f32 %v58, %v68
    %v72 = vmul.f32 %v61, %v68
    %v73 = vsub.f32 %v45, %v69
    %v74 = vsub.f32 %v46, %v70
    %v75 = vsub.f32 %v47, %v71
    %v76 = vsub.f32 %v48, %v72
    %v77 = vmul.f32 %v73, %v73
    %v78 = vmul.f32 %v74, %v74
    %v79 = vmul.f32 %v75, %v75
    %v80 = vmul.f32 %v76, %v76
    %v81 = vsel %vm49, %v77, 0.0
    %82 = vadd.xlane.f32.xlu0 %v81
    %v83 = vpop.xlane.xlu0 %82
    %v84 = vsel %vm49, %v78, 0.0
    %85 = vadd.xlane.f32.xlu0 %v84
    %v86 = vpop.xlane.xlu0 %85
    %v87 = vsel %vm49, %v79, 0.0
    %88 = vadd.xlane.f32.xlu0 %v87
    %v89 = vpop.xlane.xlu0 %88
    %v90 = vsel %vm49, %v80, 0.0
    %91 = vadd.xlane.f32.xlu0 %v90
    %v92 = vpop.xlane.xlu0 %91
    %v93 = vmul.f32 %v83, %v68
    %v94 = vmul.f32 %v86, %v68
    %v95 = vmul.f32 %v89, %v68
    %v96 = vmul.f32 %v92, %v68
    %v97 = vadd.f32 %v93, 1e-05
    %v98 = vadd.f32 %v94, 1e-05
    %v99 = vadd.f32 %v95, 1e-05
    %v100 = vadd.f32 %v96, 1e-05
    %v101 = vrsqrt.pop %v97
    %v102 = vmul.f32 %v101, %v97
    %v103 = vmul.f32 %v102, %v101
    %v104 = vmul.f32 0.5, %v103
    %v105 = vsub.f32 1.5, %v104
    %v106 = vmul.f32 %v101, %v105
    %vm107 = vweird.f32 %v97
    %vm108 = vweird.f32 %v101
    %vm109 = vmor %vm107, %vm108
    %v110 = vsel %vm109, %v101, %v106
    %v111 = vrsqrt.pop %v98
    %v112 = vmul.f32 %v111, %v98
    %v113 = vmul.f32 %v112, %v111
    %v114 = vmul.f32 0.5, %v113
    %v115 = vsub.f32 1.5, %v114
    %v116 = vmul.f32 %v111, %v115
    %vm117 = vweird.f32 %v98
    %vm118 = vweird.f32 %v111
    %vm119 = vmor %vm117, %vm118
    %v120 = vsel %vm119, %v111, %v116
    %v121 = vrsqrt.pop %v99
    %v122 = vmul.f32 %v121, %v99
    %v123 = vmul.f32 %v122, %v121
    %v124 = vmul.f32 0.5, %v123
    %v125 = vsub.f32 1.5, %v124
    %v126 = vmul.f32 %v121, %v125
    %vm127 = vweird.f32 %v99
    %vm128 = vweird.f32 %v121
    %vm129 = vmor %vm127, %vm128
    %v130 = vsel %vm129, %v121, %v126
    %v131 = vrsqrt.pop %v100
    %v132 = vmul.f32 %v131, %v100
    %v133 = vmul.f32 %v132, %v131
    %v134 = vmul.f32 0.5, %v133
    %v135 = vsub.f32 1.5, %v134
    %v136 = vmul.f32 %v131, %v135
    %vm137 = vweird.f32 %v100
    %vm138 = vweird.f32 %v131
    %vm139 = vmor %vm137, %vm138
    %v140 = vsel %vm139, %v131, %v136
    %v141 = vmul.f32 %v73, %v110
    %v142 = vmul.f32 %v74, %v120
    %v143 = vmul.f32 %v75, %v130
    %v144 = vmul.f32 %v76, %v140
    %v145 = vld [vmem:[#allocation5] sm:$0x1]
    %v147 = vperm.slane %v145, 0
    %v149 = vmul.f32 %v141, %v147
    %v150 = vmul.f32 %v142, %v147
    %v151 = vmul.f32 %v143, %v147
    %v152 = vmul.f32 %v144, %v147
    %v153 = vld [vmem:[%s2] sm:$0x1]
    %v155 = vperm.slane %v153, 0
    %v157 = vadd.f32 %v149, %v155
    %v158 = vadd.f32 %v150, %v155
    %v159 = vadd.f32 %v151, %v155
    %v160 = vadd.f32 %v152, %v155
    %v161 = vpack.c.bf16 %v157, %v157
    %v162 = vpack.c.bf16 %v158, %v158
    %v163 = vpack.c.bf16 %v159, %v159
    %v164 = vpack.c.bf16 %v160, %v160
    %vm165 = vcmask 257024
    %166 = vst.msk [vmem:[#allocation7] sm:$0xf] %vm165, %v161
    %167 = vst.msk [vmem:[#allocation7 + $0x4] sm:$0xf] %vm165, %v162
    %168 = vst.msk [vmem:[#allocation7 + $0x8] sm:$0xf] %vm165, %v163
    %169 = vst.msk [vmem:[#allocation7 + $0xc] sm:$0xf] %vm165, %v164
    // Predicated region
    $region22: #{tpu_custom_call.1} parent=1 // pred_check
      _
    $region23: #{tpu_custom_call.1} parent=1 // pred_check_branch
      %171 = sbr.rel (0) target = $region25
    $region24: #{tpu_custom_call.1} parent=1 // pred_region
      %173 = vsyncadd [#allocation4], 0
      %s174 = sshll.u32 [#allocation7], 4
      %s175 = int_to_ptr.vmem [resolvable:$true] %s174
      %s176 = sshll.u32 %s3, 4
      %s177 = int_to_ptr.hbm [resolvable:$true] %s176
      %182 = dma.vmem_to_hbm [thread:$0]  %s175, 256, %s177, [#allocation4], 64, 64, 4
    $region25: #{tpu_custom_call.1} parent=1 // pred_fallthru
      _
    // Predicated region
    $region26: #{tpu_custom_call.1} parent=1 // pred_check
      _
    $region27: #{tpu_custom_call.1} parent=1 // pred_check_branch
      %184 = sbr.rel (0) target = $region29
    $region28: #{tpu_custom_call.1} parent=1 // pred_region
      %186 = dma.done [#allocation4], 256
    $region29: #{tpu_custom_call.1} parent=1 // pred_fallthru
      _
    %187 = vsyncpa [#allocation3], 1
    %188 = vsyncpa [#allocation6], 1
    %189 = vsyncpa [#allocation4], 1

</llo_original>
